<compile_context>
chip_gen: v7x
topology: tpu7x:2x2x1
jax: 0.10.0
libtpu: 0.0.40
codegen_flags: <defaults>
</compile_context>

<pallas_src>
import functools
import math

import jax
import jax.numpy as jnp
from jax.experimental import pallas as pl
from jax.experimental.pallas import tpu as pltpu


# ------------------------------ fused kernel --------------------------------

def _fused_qkv_lora_kernel(x_ref, w_ref, b_ref, a_ref, bl_ref, o_ref, *, scaling):
    """One grid step: rows tile (tm, C) x output-column tile (tn).

    out = x @ W_eff + b_eff + scaling * (x @ A_cat^T) @ B_cat
      - W_eff columns already hold [SVD_q | base-K | SVD_v] weights, so the
        torch in-place slice assignment costs nothing here.
      - B_cat is zero on the K columns, so the K slice gets exactly the base qkv.
      - The (tm, 2r) LoRA intermediate stays on-chip (no HBM round trip).
    """
    x = x_ref[...]                                                        # (tm, C)  bf16
    base = jnp.dot(x, w_ref[...], preferred_element_type=jnp.float32)    # (tm, tn) f32 acc
    u = jnp.dot(x, a_ref[...], preferred_element_type=jnp.float32)       # (tm, 2r) f32
    delta = jnp.dot(u.astype(bl_ref.dtype), bl_ref[...],
                    preferred_element_type=jnp.float32)                  # (tm, tn) f32
    # single lane-dense store per step (bias block is (1, tn); broadcast is free)
    o_ref[...] = base + b_ref[...] + scaling * delta


def _pick_tile(total, preferred, align):
    """Largest divisor of `total` that is a multiple of `align` and <= preferred;
    falls back to the full extent (always a legal block shape)."""
    best = None
    cap = min(total, preferred)
    for cand in range(align, cap + 1, align):
        if total % cand == 0:
            best = cand
    return best if best is not None else total


def incre_lora_qkv(x, params, *, r, lora_alpha, tm=128, tn=None,
                   compute_dtype=jnp.bfloat16):
    """x: (B, N, C) -> (B, N, 3C), matching _IncreLoRA_qkv.forward."""
    B, N, C = x.shape
    M = B * N
    Nout = 3 * C
    scaling = float(lora_alpha) / (r + 1e-5)

    # -------- parameter setup (plain-JAX glue, done once per call) ----------
    w_qkv, b_qkv = params["qkv_w"], params["qkv_b"]        # (3C, C), (3C,)
    wq, bq = params["q_w"], params["q_b"]                  # (C, C), (C,)
    wv, bv = params["v_w"], params["v_b"]
    aq, eq, bq_l = params["q_la"], params["q_le"], params["q_lb"]   # (r,C),(r,1),(C,r)
    av, ev, bv_l = params["v_la"], params["v_le"], params["v_lb"]

    # effective dense weight / bias: [ SVD_q | base qkv K-slice | SVD_v ]
    w_eff = jnp.concatenate([wq.T, w_qkv[C:2 * C, :].T, wv.T], axis=1)       # (C, 3C)
    b_eff = jnp.concatenate([bq, b_qkv[C:2 * C], bv]).reshape(1, Nout)       # (1, 3C)

    # LoRA factors: stacked (A*E) -> one (tm, 2r) intermediate in the kernel;
    # B factors placed in a zero-padded (2r, 3C) slab so q/v deltas land on
    # their own output columns and the K slice receives exactly zero.
    a_cat_t = jnp.concatenate([aq * eq, av * ev], axis=0).T                  # (C, 2r)
    b_cat = jnp.zeros((2 * r, Nout), jnp.float32)
    b_cat = b_cat.at[:r, :C].set(bq_l.T)
    b_cat = b_cat.at[r:, 2 * C:].set(bv_l.T)                                 # (2r, 3C)

    # ------------------------------ tiling ----------------------------------
    x2 = x.reshape(M, C)
    if tn is None:
        tn = _pick_tile(Nout, 512, 128)       # lane-dense output tiles
    tm = max(8, min(tm, ((M + 7) // 8) * 8))  # multiple of 8 sublanes
    Mp = pl.cdiv(M, tm) * tm
    if Mp != M:
        x2 = jnp.pad(x2, ((0, Mp - M), (0, 0)))
    grid = (Mp // tm, Nout // tn)

    out = pl.pallas_call(
        functools.partial(_fused_qkv_lora_kernel, scaling=scaling),
        out_shape=jax.ShapeDtypeStruct((Mp, Nout), jnp.float32),
        grid=grid,
        in_specs=[
            pl.BlockSpec((tm, C), lambda i, j: (i, 0)),       # x row tile
            pl.BlockSpec((C, tn), lambda i, j: (0, j)),       # W_eff column tile
            pl.BlockSpec((1, tn), lambda i, j: (0, j)),       # fused bias
            pl.BlockSpec((C, 2 * r), lambda i, j: (0, 0)),    # stacked (A*E)^T (tiny)
            pl.BlockSpec((2 * r, tn), lambda i, j: (0, j)),   # zero-padded B slab
        ],
        out_specs=pl.BlockSpec((tm, tn), lambda i, j: (i, j)),
        compiler_params=pltpu.CompilerParams(
            dimension_semantics=("parallel", "parallel")),
    )(
        x2.astype(compute_dtype),
        w_eff.astype(compute_dtype),
        b_eff.astype(jnp.float32),
        a_cat_t.astype(compute_dtype),
        b_cat.astype(compute_dtype),
    )
    return out[:M].reshape(B, N, Nout)


# ------------------------- plain-JAX reference (f32) -------------------------

def reference_forward(x, params, *, r, lora_alpha):
    B, N, C = x.shape
    s = lora_alpha / (r + 1e-5)
    x2 = x.reshape(-1, C).astype(jnp.float32)
    with jax.default_matmul_precision("highest"):
        qkv = x2 @ params["qkv_w"].T + params["qkv_b"]
        new_q = (x2 @ params["q_w"].T + params["q_b"]
                 + (x2 @ (params["q_la"] * params["q_le"]).T) @ params["q_lb"].T * s)
        new_v = (x2 @ params["v_w"].T + params["v_b"]
                 + (x2 @ (params["v_la"] * params["v_le"]).T) @ params["v_lb"].T * s)
    out = jnp.concatenate([new_q, qkv[:, C:2 * C], new_v], axis=1)
    return out.reshape(B, N, 3 * C)


# ----------------------------------- main ------------------------------------

if __name__ == "__main__":
    key = jax.random.PRNGKey(0)
    B, N_SEQ, C = 2, 128, 128          # tokens (B, N, C); output width 3C = 384 (lane-dense)
    R, ALPHA = 4, 4

    ks = jax.random.split(key, 13)

    def nrm(k, shape, std=0.02):
        return std * jax.random.normal(k, shape, jnp.float32)

    params = dict(
        qkv_w=nrm(ks[0], (3 * C, C)), qkv_b=nrm(ks[1], (3 * C,)),
        q_w=nrm(ks[2], (C, C)), q_b=nrm(ks[3], (C,)),
        q_la=nrm(ks[4], (R, C)), q_le=nrm(ks[5], (R, 1)), q_lb=nrm(ks[6], (C, R)),
        v_w=nrm(ks[7], (C, C)), v_b=nrm(ks[8], (C,)),
        v_la=nrm(ks[9], (R, C)), v_le=nrm(ks[10], (R, 1)), v_lb=nrm(ks[11], (C, R)),
    )
    x = jax.random.normal(ks[12], (B, N_SEQ, C), jnp.float32)

    fwd = jax.jit(functools.partial(incre_lora_qkv, r=R, lora_alpha=ALPHA))
    out = jax.block_until_ready(fwd(x, params))
    assert out.shape == (B, N_SEQ, 3 * C)

    ref = reference_forward(x, params, r=R, lora_alpha=ALPHA)
    err = float(jnp.max(jnp.abs(out - ref)))
    assert err < 5e-2, f"max abs error too large: {err}"
    assert math.isfinite(err)

    print("KERNEL_OK")
</pallas_src>

<mosaic_0001>
module attributes {stable_mosaic.version = 11 : i64} {
  func.func @_fused_qkv_lora_kernel(%arg0: i32, %arg1: i32, %arg2: memref<128x128xbf16, #tpu.memory_space<vmem>>, %arg3: memref<128x384xbf16, #tpu.memory_space<vmem>>, %arg4: memref<1x384xf32, #tpu.memory_space<vmem>>, %arg5: memref<128x8xbf16, #tpu.memory_space<vmem>>, %arg6: memref<8x384xbf16, #tpu.memory_space<vmem>>, %arg7: memref<128x384xf32, #tpu.memory_space<vmem>>) attributes {dimension_semantics = [#tpu.dimension_semantics<parallel>, #tpu.dimension_semantics<parallel>], iteration_bounds = array<i64: 2, 1>, scalar_prefetch = 0 : i64, scratch_operands = 0 : i64, tpu.core_type = #tpu.core_type<tc>, window_params = [{transform_indices = @transform_0, window_bounds = array<i64: 128, 128>}, {transform_indices = @transform_1, window_bounds = array<i64: 128, 384>}, {transform_indices = @transform_2, window_bounds = array<i64: 1, 384>}, {pipeline_mode = #tpu.pipeline_mode<synchronous>, transform_indices = @transform_3, window_bounds = array<i64: 128, 8>}, {transform_indices = @transform_4, window_bounds = array<i64: 8, 384>}, {transform_indices = @transform_5, window_bounds = array<i64: 128, 384>}]} {
    %c0 = arith.constant 0 : index
    %c0_0 = arith.constant 0 : index
    %0 = vector.load %arg2[%c0, %c0_0] : memref<128x128xbf16, #tpu.memory_space<vmem>>, vector<128x128xbf16>
    %c0_1 = arith.constant 0 : index
    %c0_2 = arith.constant 0 : index
    %1 = vector.load %arg3[%c0_1, %c0_2] : memref<128x384xbf16, #tpu.memory_space<vmem>>, vector<128x384xbf16>
    %cst = arith.constant dense<0.000000e+00> : vector<128x384xf32>
    %2 = tpu.matmul %0, %1, %cst {dimension_numbers = #tpu.dot_dimension_numbers<[1], [0], [0], [1], [0, 0, 1, 1], [], []>} : vector<128x128xbf16>, vector<128x384xbf16>, vector<128x384xf32> -> vector<128x384xf32>
    %c0_3 = arith.constant 0 : index
    %c0_4 = arith.constant 0 : index
    %3 = vector.load %arg5[%c0_3, %c0_4] : memref<128x8xbf16, #tpu.memory_space<vmem>>, vector<128x8xbf16>
    %cst_5 = arith.constant dense<0.000000e+00> : vector<128x8xf32>
    %4 = tpu.matmul %0, %3, %cst_5 {dimension_numbers = #tpu.dot_dimension_numbers<[1], [0], [0], [1], [0, 0, 1, 1], [], []>} : vector<128x128xbf16>, vector<128x8xbf16>, vector<128x8xf32> -> vector<128x8xf32>
    %5 = arith.truncf %4 : vector<128x8xf32> to vector<128x8xbf16>
    %c0_6 = arith.constant 0 : index
    %c0_7 = arith.constant 0 : index
    %6 = vector.load %arg6[%c0_6, %c0_7] : memref<8x384xbf16, #tpu.memory_space<vmem>>, vector<8x384xbf16>
    %cst_8 = arith.constant dense<0.000000e+00> : vector<128x384xf32>
    %7 = tpu.matmul %5, %6, %cst_8 {dimension_numbers = #tpu.dot_dimension_numbers<[1], [0], [0], [1], [0, 0, 1, 1], [], []>} : vector<128x8xbf16>, vector<8x384xbf16>, vector<128x384xf32> -> vector<128x384xf32>
    %c0_9 = arith.constant 0 : index
    %c0_10 = arith.constant 0 : index
    %8 = vector.load %arg4[%c0_9, %c0_10] : memref<1x384xf32, #tpu.memory_space<vmem>>, vector<1x384xf32>
    %9 = vector.broadcast %8 : vector<1x384xf32> to vector<128x384xf32>
    %10 = arith.addf %2, %9 : vector<128x384xf32>
    %cst_11 = arith.constant 0.999997496 : f32
    %11 = vector.broadcast %cst_11 : f32 to vector<128x384xf32>
    %12 = arith.mulf %11, %7 : vector<128x384xf32>
    %13 = arith.addf %10, %12 : vector<128x384xf32>
    %c0_12 = arith.constant 0 : index
    %c0_13 = arith.constant 0 : index
    %14 = vector.load %arg7[%c0_12, %c0_13] : memref<128x384xf32, #tpu.memory_space<vmem>>, vector<128x384xf32>
    tpu.vector_store %arg7[%c0_12, %c0_13], %13 {strides = array<i32>} : memref<128x384xf32, #tpu.memory_space<vmem>>, vector<128x384xf32>,
    return
  }
  func.func @transform_0(%arg0: i32, %arg1: i32) -> (i32, i32) {
    %c0_i32 = arith.constant 0 : i32
    %c0_i32_0 = arith.constant 0 : i32
    return %arg0, %c0_i32 : i32, i32
  }
  func.func @transform_1(%arg0: i32, %arg1: i32) -> (i32, i32) {
    %c0_i32 = arith.constant 0 : i32
    %c0_i32_0 = arith.constant 0 : i32
    return %c0_i32, %arg1 : i32, i32
  }
  func.func @transform_2(%arg0: i32, %arg1: i32) -> (i32, i32) {
    %c0_i32 = arith.constant 0 : i32
    %c0_i32_0 = arith.constant 0 : i32
    return %c0_i32, %arg1 : i32, i32
  }
  func.func @transform_3(%arg0: i32, %arg1: i32) -> (i32, i32) {
    %c0_i32 = arith.constant 0 : i32
    %c0_i32_0 = arith.constant 0 : i32
    %c0_i32_1 = arith.constant 0 : i32
    return %c0_i32, %c0_i32_0 : i32, i32
  }
  func.func @transform_4(%arg0: i32, %arg1: i32) -> (i32, i32) {
    %c0_i32 = arith.constant 0 : i32
    %c0_i32_0 = arith.constant 0 : i32
    return %c0_i32, %arg1 : i32, i32
  }
  func.func @transform_5(%arg0: i32, %arg1: i32) -> (i32, i32) {
    %c0_i32 = arith.constant 0 : i32
    return %arg0, %arg1 : i32, i32
  }
}

</mosaic_0001>

<llo_original>
// kernel: incre_lora_qkv.1
$region0: #{incre_lora_qkv.1}
  #allocation0 [shape = 'u32[]', space=smem, size = 0x4, offset = 0x4, fixed_abs, tag = 'smem constant byte address 0x4 - core index']
  #allocation1 [shape = 'u32[144,128]{1,0:T(1,128)}', space=vmem, size = 0x12000, scoped, tag = 'internal scratch']
  %s0 = inlined_call_operand.vmem [shape: bf16[256,128], index: 0, kind: input, shape index: {}]
  %s1 = inlined_call_operand.vmem [shape: bf16[128,384], index: 1, kind: input, shape index: {}]
  %s2 = inlined_call_operand.vmem [shape: f32[1,384], index: 2, kind: input, shape index: {}]
  %s3 = inlined_call_operand.vmem [shape: bf16[128,8], index: 3, kind: input, shape index: {}]
  %s4 = inlined_call_operand.vmem [shape: bf16[8,384], index: 4, kind: input, shape index: {}]
  %s5 = inlined_call_operand.hbm [shape: f32[256,384], index: 5, kind: output, shape index: {}]
  %s6 = sld [smem:[#allocation0]]
  $region53: #{incre_lora_qkv.1} parent=0
    _
  %s8 = ssub.s32 1, %s6
  %s9 = scalar_select 0, %s8, %s6
  $region1: #{incre_lora_qkv.1} parent=0
    #allocation2 [shape = 'u8[393216]{0}', space=vmem, size = 0x60000, scoped, tag = 'output window, operand 0']
    #allocation3 [shape = 's32[2]{0}', space=sflag, size = 0x8, scoped, tag = 'scoped memory for incre_lora_qkv.1']
    %10 = vsyncpa [#allocation3], 0
    %s11 = scalar_lea.sflag [#allocation3], 1
    %12 = vsyncpa %s11, 0
    loop: start=0, step=1, limit=4
    $region2: #{incre_lora_qkv.1} parent=1 // loop_pre_header
      _
    $region3: #{incre_lora_qkv.1} parent=1 // loop_header
      %s14 = sphi 0, %s18
      %p15 = scmp.ge.s32.totalorder %s14, 4
      %s21 = sphi 0, %s33
      %s22 = sphi 0, %s29
      %s23 = sphi 0, %s21
      %s24 = sphi 0, %s22
      %s25 = sphi 0, %s23
      %s26 = sphi 0, %s24
      %s36 = sphi 0, %s38
      %s39 = sphi 0, %s36
      %s40 = sphi 0, %s39
      %s56 = sphi 0, %s40
      %s62 = sphi 0, %s64
      %s65 = sphi 0, %s62
      %s66 = sphi 0, %s65
      %s82 = sphi 0, %s66
      %s88 = sphi 0, %s90
      %s91 = sphi 0, %s88
      %s92 = sphi 0, %s91
      %s108 = sphi 0, %s92
      %s112 = sphi 0, %s112
      %s114 = sphi 0, %s112
      %s115 = sphi 0, %s114
      %s129 = sphi 0, %s115
      %s135 = sphi 0, %s137
      %s138 = sphi 0, %s135
      %s139 = sphi 0, %s138
      %s155 = sphi 0, %s139
      %s163 = sphi 0, %s165
      %s166 = sphi 0, %s163
      %s167 = sphi 0, %s166
      %s183 = sphi 0, %s167
    $region4: #{incre_lora_qkv.1} parent=1 // loop_header_branch
      %17 = sbr.rel (%p15) target = $region8
    $region5: #{incre_lora_qkv.1} parent=1 // loop_body
      %s19 = ssub.s32 %s14, 1
      %s20 = ssub.s32 %s14, 2
      %s27 = sadd.s32 1, %s22
      %p28 = scmp.ge.s32.totalorder %s27, 1
      %s29 = scalar_select %p28, 0, %s27
      %s30 = sadd.s32 1, %s21
      %s31 = scalar_select %p28, %s30, %s21
      %p32 = scmp.ge.s32.totalorder %s31, 2
      %s33 = scalar_select %p32, 0, %s31
      %s34 = ssub.s32 %s21, %s33
      %p35 = scmp.eq.s32.totalorder %s34, 0
      %s37 = sadd.s32 %s36, 1
      %s38 = scalar_select %p35, %s36, %s37
      %p41 = pneg %p35
      %p42 = scmp.eq.s32.totalorder %s14, 1
      %p43 = por %p41, %p42
      %p44 = scmp.ne.s32.totalorder %s36, %s39
      %p45 = scmp.eq.s32.totalorder %s14, 0
      %p46 = por %p44, %p45
      %p47 = scmp.ne.s32.totalorder %s36, %s39
      %p48 = scmp.eq.s32.totalorder %s19, 1
      %p49 = por %p47, %p48
      %p50 = scmp.ne.s32.totalorder %s39, %s40
      %p51 = scmp.eq.s32.totalorder %s19, 0
      %p52 = por %p50, %p51
      %p53 = scmp.ne.s32.totalorder %s39, %s40
      %p54 = scmp.eq.s32.totalorder %s20, 1
      %p55 = por %p53, %p54
      %p57 = scmp.ne.s32.totalorder %s40, %s56
      %p58 = scmp.eq.s32.totalorder %s20, 0
      %p59 = por %p57, %p58
      %s60 = ssub.s32 %s22, %s29
      %p61 = scmp.eq.s32.totalorder %s60, 0
      %s63 = sadd.s32 %s62, 1
      %s64 = scalar_select %p61, %s62, %s63
      %p67 = pneg %p61
      %p68 = scmp.eq.s32.totalorder %s14, 1
      %p69 = por %p67, %p68
      %p70 = scmp.ne.s32.totalorder %s62, %s65
      %p71 = scmp.eq.s32.totalorder %s14, 0
      %p72 = por %p70, %p71
      %p73 = scmp.ne.s32.totalorder %s62, %s65
      %p74 = scmp.eq.s32.totalorder %s19, 1
      %p75 = por %p73, %p74
      %p76 = scmp.ne.s32.totalorder %s65, %s66
      %p77 = scmp.eq.s32.totalorder %s19, 0
      %p78 = por %p76, %p77
      %p79 = scmp.ne.s32.totalorder %s65, %s66
      %p80 = scmp.eq.s32.totalorder %s20, 1
      %p81 = por %p79, %p80
      %p83 = scmp.ne.s32.totalorder %s66, %s82
      %p84 = scmp.eq.s32.totalorder %s20, 0
      %p85 = por %p83, %p84
      %s86 = ssub.s32 %s22, %s29
      %p87 = scmp.eq.s32.totalorder %s86, 0
      %s89 = sadd.s32 %s88, 1
      %s90 = scalar_select %p87, %s88, %s89
      %p93 = pneg %p87
      %p94 = scmp.eq.s32.totalorder %s14, 1
      %p95 = por %p93, %p94
      %p96 = scmp.ne.s32.totalorder %s88, %s91
      %p97 = scmp.eq.s32.totalorder %s14, 0
      %p98 = por %p96, %p97
      %p99 = scmp.ne.s32.totalorder %s88, %s91
      %p100 = scmp.eq.s32.totalorder %s19, 1
      %p101 = por %p99, %p100
      %p102 = scmp.ne.s32.totalorder %s91, %s92
      %p103 = scmp.eq.s32.totalorder %s19, 0
      %p104 = por %p102, %p103
      %p105 = scmp.ne.s32.totalorder %s91, %s92
      %p106 = scmp.eq.s32.totalorder %s20, 1
      %p107 = por %p105, %p106
      %p109 = scmp.ne.s32.totalorder %s92, %s108
      %p110 = scmp.eq.s32.totalorder %s20, 0
      %p111 = por %p109, %p110
      %s113 = sadd.s32 %s112, 1
      %p116 = scmp.eq.s32.totalorder %s14, 1
      %p117 = scmp.ne.s32.totalorder %s112, %s114
      %p118 = scmp.eq.s32.totalorder %s14, 0
      %p119 = por %p117, %p118
      %p120 = scmp.ne.s32.totalorder %s112, %s114
      %p121 = scmp.eq.s32.totalorder %s19, 1
      %p122 = por %p120, %p121
      %p123 = scmp.ne.s32.totalorder %s114, %s115
      %p124 = scmp.eq.s32.totalorder %s19, 0
      %p125 = por %p123, %p124
      %p126 = scmp.ne.s32.totalorder %s114, %s115
      %p127 = scmp.eq.s32.totalorder %s20, 1
      %p128 = por %p126, %p127
      %p130 = scmp.ne.s32.totalorder %s115, %s129
      %p131 = scmp.eq.s32.totalorder %s20, 0
      %p132 = por %p130, %p131
      %s133 = ssub.s32 %s22, %s29
      %p134 = scmp.eq.s32.totalorder %s133, 0
      %s136 = sadd.s32 %s135, 1
      %s137 = scalar_select %p134, %s135, %s136
      %p140 = pneg %p134
      %p141 = scmp.eq.s32.totalorder %s14, 1
      %p142 = por %p140, %p141
      %p143 = scmp.ne.s32.totalorder %s135, %s138
      %p144 = scmp.eq.s32.totalorder %s14, 0
      %p145 = por %p143, %p144
      %p146 = scmp.ne.s32.totalorder %s135, %s138
      %p147 = scmp.eq.s32.totalorder %s19, 1
      %p148 = por %p146, %p147
      %p149 = scmp.ne.s32.totalorder %s138, %s139
      %p150 = scmp.eq.s32.totalorder %s19, 0
      %p151 = por %p149, %p150
      %p152 = scmp.ne.s32.totalorder %s138, %s139
      %p153 = scmp.eq.s32.totalorder %s20, 1
      %p154 = por %p152, %p153
      %p156 = scmp.ne.s32.totalorder %s139, %s155
      %p157 = scmp.eq.s32.totalorder %s20, 0
      %p158 = por %p156, %p157
      %s159 = ssub.s32 %s21, %s33
      %s160 = ssub.s32 %s22, %s29
      %s161 = sor.u32 %s159, %s160
      %p162 = scmp.eq.s32.totalorder %s161, 0
      %s164 = sadd.s32 %s163, 1
      %s165 = scalar_select %p162, %s163, %s164
      %p168 = pneg %p162
      %p169 = scmp.eq.s32.totalorder %s14, 1
      %p170 = por %p168, %p169
      %p171 = scmp.ne.s32.totalorder %s163, %s166
      %p172 = scmp.eq.s32.totalorder %s14, 0
      %p173 = por %p171, %p172
      %p174 = scmp.ne.s32.totalorder %s163, %s166
      %p175 = scmp.eq.s32.totalorder %s19, 1
      %p176 = por %p174, %p175
      %p177 = scmp.ne.s32.totalorder %s166, %s167
      %p178 = scmp.eq.s32.totalorder %s19, 0
      %p179 = por %p177, %p178
      %p180 = scmp.ne.s32.totalorder %s166, %s167
      %p181 = scmp.eq.s32.totalorder %s20, 1
      %p182 = por %p180, %p181
      %p184 = scmp.ne.s32.totalorder %s167, %s183
      %p185 = scmp.eq.s32.totalorder %s20, 0
      %p186 = por %p184, %p185
      %p187 = scmp.le.s32.totalorder 1, %s14
      %p188 = scmp.lt.s32.totalorder %s14, 3
      %p189 = pnand %p187, %p188
      %p190 = pneg %p189
      // Predicated region
      $region9: #{incre_lora_qkv.1} parent=5 // pred_check
        _
      $region10: #{incre_lora_qkv.1} parent=5 // pred_check_branch
        %192 = sbr.rel (%p189) target = $region12
      $region11: #{incre_lora_qkv.1} parent=5 // pred_region
        %s193 = ssub.s32 %s14, 1
        // Predicated region
        $region13: #{incre_lora_qkv.1} parent=11 // pred_check
          %p194 = pneg %p78
        $region14: #{incre_lora_qkv.1} parent=11 // pred_check_branch
          %196 = sbr.rel (%p194) target = $region16
        $region15: #{incre_lora_qkv.1} parent=11 // pred_region
          %s197 = smul.u32 3, %s24
          %p198 = scmp.lt.s32.totalorder %s197, 2
          %s199 = scalar_select %p198, %s197, 2
          %s200 = smul.addr %s199, 4
          %s201 = scalar_lea.vmem %s1, %s200
          %s202 = smul.u32 3, %s24
        $region16: #{incre_lora_qkv.1} parent=11 // pred_fallthru
          _
        // Predicated region
        $region17: #{incre_lora_qkv.1} parent=11 // pred_check
          %p203 = pneg %p104
        $region18: #{incre_lora_qkv.1} parent=11 // pred_check_branch
          %205 = sbr.rel (%p203) target = $region20
        $region19: #{incre_lora_qkv.1} parent=11 // pred_region
          %s206 = smul.u32 3, %s24
          %p207 = scmp.lt.s32.totalorder %s206, 2
          %s208 = scalar_select %p207, %s206, 2
          %s209 = scalar_lea.vmem %s2, %s208
          %s210 = smul.u32 3, %s24
        $region20: #{incre_lora_qkv.1} parent=11 // pred_fallthru
          _
        // Predicated region
        $region21: #{incre_lora_qkv.1} parent=11 // pred_check
          %p211 = pneg %p125
        $region22: #{incre_lora_qkv.1} parent=11 // pred_check_branch
          %213 = sbr.rel (%p211) target = $region24
        $region23: #{incre_lora_qkv.1} parent=11 // pred_region
          _
        $region24: #{incre_lora_qkv.1} parent=11 // pred_fallthru
          _
        // Predicated region
        $region25: #{incre_lora_qkv.1} parent=11 // pred_check
          %p214 = pneg %p151
        $region26: #{incre_lora_qkv.1} parent=11 // pred_check_branch
          %216 = sbr.rel (%p214) target = $region28
        $region27: #{incre_lora_qkv.1} parent=11 // pred_region
          %s217 = smul.u32 3, %s24
          %p218 = scmp.lt.s32.totalorder %s217, 2
          %s219 = scalar_select %p218, %s217, 2
          %s220 = smul.addr %s219, 4
          %s221 = scalar_lea.vmem %s4, %s220
          %s222 = smul.u32 3, %s24
        $region28: #{incre_lora_qkv.1} parent=11 // pred_fallthru
          _
      $region12: #{incre_lora_qkv.1} parent=5 // pred_fallthru
        _
      %p223 = scmp.lt.s32.totalorder %s14, 2
      // Predicated region
      $region29: #{incre_lora_qkv.1} parent=5 // pred_check
        %p224 = pneg %p223
      $region30: #{incre_lora_qkv.1} parent=5 // pred_check_branch
        %226 = sbr.rel (%p224) target = $region32
      $region31: #{incre_lora_qkv.1} parent=5 // pred_region
        // Predicated region
        $region33: #{incre_lora_qkv.1} parent=31 // pred_check
          %p227 = pneg %p46
        $region34: #{incre_lora_qkv.1} parent=31 // pred_check_branch
          %229 = sbr.rel (%p227) target = $region36
        $region35: #{incre_lora_qkv.1} parent=31 // pred_region
          %s230 = smul.u32 16, %s21
          %p231 = scmp.lt.s32.totalorder %s230, 31
          %s232 = scalar_select %p231, %s230, 31
          %s233 = smul.addr %s232, 4
          %s234 = scalar_lea.vmem %s0, %s233
          %s235 = smul.u32 16, %s21
        $region36: #{incre_lora_qkv.1} parent=31 // pred_fallthru
          _
      $region32: #{incre_lora_qkv.1} parent=5 // pred_fallthru
        _
      %p236 = scmp.le.s32.totalorder 1, %s14
      %p237 = scmp.lt.s32.totalorder %s14, 3
      %p238 = pnand %p236, %p237
      %p239 = pneg %p238
      // Predicated region
      $region37: #{incre_lora_qkv.1} parent=5 // pred_check
        _
      $region38: #{incre_lora_qkv.1} parent=5 // pred_check_branch
        %241 = sbr.rel (%p238) target = $region40
      $region39: #{incre_lora_qkv.1} parent=5 // pred_region
        %s242 = ssub.s32 %s14, 1
        %s243 = smul.u32 16, %s23
        %p244 = scmp.lt.s32.totalorder %s243, 31
        %s245 = scalar_select %p244, %s243, 31
        %s246 = smul.addr %s245, 4
        %s247 = scalar_lea.vmem %s0, %s246
        %p248 = pneg %p52
        %p249 = pneg %p49
        %s250 = smul.u32 3, %s24
        %p251 = scmp.lt.s32.totalorder %s250, 2
        %s252 = scalar_select %p251, %s250, 2
        %s253 = smul.addr %s252, 4
        %s254 = scalar_lea.vmem %s1, %s253
        %p255 = pneg %p78
        %p256 = pneg %p75
        %s257 = smul.u32 3, %s24
        %p258 = scmp.lt.s32.totalorder %s257, 2
        %s259 = scalar_select %p258, %s257, 2
        %s260 = scalar_lea.vmem %s2, %s259
        %p261 = pneg %p104
        %p262 = pneg %p101
        %p263 = pneg %p125
        %p264 = pneg %p122
        %s265 = smul.u32 3, %s24
        %p266 = scmp.lt.s32.totalorder %s265, 2
        %s267 = scalar_select %p266, %s265, 2
        %s268 = smul.addr %s267, 4
        %s269 = scalar_lea.vmem %s4, %s268
        %p270 = pneg %p151
        %p271 = pneg %p148
        %p272 = pneg %p179
        %p273 = pneg %p176
        %s274 = sand.u32 %s166, 1
        %s275 = scalar_lea.sflag [#allocation3], %s274
        %s276 = sand.u32 %s166, 1
        %s277 = smul.addr %s276, 384
        %s278 = scalar_lea.vmem [#allocation2], %s277
        %s279 = smul.u32 16, %s23
        %p280 = scmp.lt.s32.totalorder %s279, 31
        %s281 = scalar_select %p280, %s279, 31
        %s282 = smul.addr %s281, 4
        %s283 = scalar_lea.vmem %s0, %s282
        %s284 = smul.u32 16, %s23
        %s285 = smul.u32 3, %s24
        %p286 = scmp.lt.s32.totalorder %s285, 2
        %s287 = scalar_select %p286, %s285, 2
        %s288 = smul.addr %s287, 4
        %s289 = scalar_lea.vmem %s1, %s288
        %s290 = smul.u32 3, %s24
        %s291 = smul.u32 3, %s24
        %p292 = scmp.lt.s32.totalorder %s291, 2
        %s293 = scalar_select %p292, %s291, 2
        %s294 = scalar_lea.vmem %s2, %s293
        %s295 = smul.u32 3, %s24
        %s296 = smul.u32 3, %s24
        %p297 = scmp.lt.s32.totalorder %s296, 2
        %s298 = scalar_select %p297, %s296, 2
        %s299 = smul.addr %s298, 4
        %s300 = scalar_lea.vmem %s4, %s299
        %s301 = smul.u32 3, %s24
        %s302 = smul.u32 16, %s23
        %s303 = smul.u32 3, %s24
        %v305 = vld [vmem:[%s283] sm:$0xf]
        %v306 = vld [vmem:[%s283 + $0x4] sm:$0xf]
        %v307 = vld [vmem:[%s283 + $0x8] sm:$0xf]
        %v308 = vld [vmem:[%s283 + $0xc] sm:$0xf]
        %v309 = vld [vmem:[%s283 + $0x10] sm:$0xf]
        %v310 = vld [vmem:[%s283 + $0x14] sm:$0xf]
        %v311 = vld [vmem:[%s283 + $0x18] sm:$0xf]
        %v312 = vld [vmem:[%s283 + $0x1c] sm:$0xf]
        %v313 = vld [vmem:[%s283 + $0x20] sm:$0xf]
        %v314 = vld [vmem:[%s283 + $0x24] sm:$0xf]
        %v315 = vld [vmem:[%s283 + $0x28] sm:$0xf]
        %v316 = vld [vmem:[%s283 + $0x2c] sm:$0xf]
        %v317 = vld [vmem:[%s283 + $0x30] sm:$0xf]
        %v318 = vld [vmem:[%s283 + $0x34] sm:$0xf]
        %v319 = vld [vmem:[%s283 + $0x38] sm:$0xf]
        %v320 = vld [vmem:[%s283 + $0x3c] sm:$0xf]
        %v321 = vld [vmem:[%s289] sm:$0xff]
        %v322 = vld [vmem:[%s289 + $0x8] sm:$0xf]
        %v323 = vld [vmem:[%s289 + $0xc] sm:$0xff]
        %v324 = vld [vmem:[%s289 + $0x14] sm:$0xf]
        %v325 = vld [vmem:[%s289 + $0x18] sm:$0xff]
        %v326 = vld [vmem:[%s289 + $0x20] sm:$0xf]
        %v327 = vld [vmem:[%s289 + $0x24] sm:$0xff]
        %v328 = vld [vmem:[%s289 + $0x2c] sm:$0xf]
        %v329 = vld [vmem:[%s289 + $0x30] sm:$0xff]
        %v330 = vld [vmem:[%s289 + $0x38] sm:$0xf]
        %v331 = vld [vmem:[%s289 + $0x3c] sm:$0xff]
        %v332 = vld [vmem:[%s289 + $0x44] sm:$0xf]
        %v333 = vld [vmem:[%s289 + $0x48] sm:$0xff]
        %v334 = vld [vmem:[%s289 + $0x50] sm:$0xf]
        %v335 = vld [vmem:[%s289 + $0x54] sm:$0xff]
        %v336 = vld [vmem:[%s289 + $0x5c] sm:$0xf]
        %v337 = vld [vmem:[%s289 + $0x60] sm:$0xff]
        %v338 = vld [vmem:[%s289 + $0x68] sm:$0xf]
        %v339 = vld [vmem:[%s289 + $0x6c] sm:$0xff]
        %v340 = vld [vmem:[%s289 + $0x74] sm:$0xf]
        %v341 = vld [vmem:[%s289 + $0x78] sm:$0xff]
        %v342 = vld [vmem:[%s289 + $0x80] sm:$0xf]
        %v343 = vld [vmem:[%s289 + $0x84] sm:$0xff]
        %v344 = vld [vmem:[%s289 + $0x8c] sm:$0xf]
        %v345 = vld [vmem:[%s289 + $0x90] sm:$0xff]
        %v346 = vld [vmem:[%s289 + $0x98] sm:$0xf]
        %v347 = vld [vmem:[%s289 + $0x9c] sm:$0xff]
        %v348 = vld [vmem:[%s289 + $0xa4] sm:$0xf]
        %v349 = vld [vmem:[%s289 + $0xa8] sm:$0xff]
        %v350 = vld [vmem:[%s289 + $0xb0] sm:$0xf]
        %v351 = vld [vmem:[%s289 + $0xb4] sm:$0xff]
        %v352 = vld [vmem:[%s289 + $0xbc] sm:$0xf]
        %v353 = vld [vmem:[%s3] sm:$0xf]
        %v354 = vld [vmem:[%s3 + $0x4] sm:$0xf]
        %v355 = vld [vmem:[%s3 + $0x8] sm:$0xf]
        %v356 = vld [vmem:[%s3 + $0xc] sm:$0xf]
        %v357 = vld [vmem:[%s3 + $0x10] sm:$0xf]
        %v358 = vld [vmem:[%s3 + $0x14] sm:$0xf]
        %v359 = vld [vmem:[%s3 + $0x18] sm:$0xf]
        %v360 = vld [vmem:[%s3 + $0x1c] sm:$0xf]
        %v361 = vld [vmem:[%s3 + $0x20] sm:$0xf]
        %v362 = vld [vmem:[%s3 + $0x24] sm:$0xf]
        %v363 = vld [vmem:[%s3 + $0x28] sm:$0xf]
        %v364 = vld [vmem:[%s3 + $0x2c] sm:$0xf]
        %v365 = vld [vmem:[%s3 + $0x30] sm:$0xf]
        %v366 = vld [vmem:[%s3 + $0x34] sm:$0xf]
        %v367 = vld [vmem:[%s3 + $0x38] sm:$0xf]
        %v368 = vld [vmem:[%s3 + $0x3c] sm:$0xf]
        %v385 = vunpack.c.l.b16 %v305
        %v386 = vunpack.c.l.b16 %v306
        %v387 = vunpack.c.l.b16 %v307
        %v388 = vunpack.c.l.b16 %v308
        %v389 = vunpack.c.l.b16 %v309
        %v390 = vunpack.c.l.b16 %v310
        %v391 = vunpack.c.l.b16 %v311
        %v392 = vunpack.c.l.b16 %v312
        %v393 = vunpack.c.l.b16 %v313
        %v394 = vunpack.c.l.b16 %v314
        %v395 = vunpack.c.l.b16 %v315
        %v396 = vunpack.c.l.b16 %v316
        %v397 = vunpack.c.l.b16 %v317
        %v398 = vunpack.c.l.b16 %v318
        %v399 = vunpack.c.l.b16 %v319
        %v400 = vunpack.c.l.b16 %v320
        %v401 = vpack.c.b16 %v386, %v385
        %v402 = vpack.c.b16 %v388, %v387
        %v403 = vpack.c.b16 %v390, %v389
        %v404 = vpack.c.b16 %v392, %v391
        %v405 = vpack.c.b16 %v394, %v393
        %v406 = vpack.c.b16 %v396, %v395
        %v407 = vpack.c.b16 %v398, %v397
        %v408 = vpack.c.b16 %v400, %v399
        %v433 = vunpack.c.l.b16 %v353
        %v434 = vunpack.c.l.b16 %v354
        %v435 = vunpack.c.l.b16 %v355
        %v436 = vunpack.c.l.b16 %v356
        %v437 = vunpack.c.l.b16 %v357
        %v438 = vunpack.c.l.b16 %v358
        %v439 = vunpack.c.l.b16 %v359
        %v440 = vunpack.c.l.b16 %v360
        %v441 = vunpack.c.l.b16 %v361
        %v442 = vunpack.c.l.b16 %v362
        %v443 = vunpack.c.l.b16 %v363
        %v444 = vunpack.c.l.b16 %v364
        %v445 = vunpack.c.l.b16 %v365
        %v446 = vunpack.c.l.b16 %v366
        %v447 = vunpack.c.l.b16 %v367
        %v448 = vunpack.c.l.b16 %v368
        %v449 = vpack.c.b16 %v434, %v433
        %v450 = vpack.c.b16 %v436, %v435
        %v451 = vpack.c.b16 %v438, %v437
        %v452 = vpack.c.b16 %v440, %v439
        %v453 = vpack.c.b16 %v442, %v441
        %v454 = vpack.c.b16 %v444, %v443
        %v455 = vpack.c.b16 %v446, %v445
        %v456 = vpack.c.b16 %v448, %v447
        %465 = vmatprep.subr.bf16.mxu0 0
        %466 = vmatpush1.bf16.msra.mxu0 %v449
        %467 = vmatprep.subr.bf16.mxu0 0
        %468 = vmatpush1.bf16.msra.mxu0 %v450
        %469 = vmatprep.subr.bf16.mxu0 0
        %470 = vmatpush1.bf16.msra.mxu0 %v451
        %471 = vmatprep.subr.bf16.mxu0 0
        %472 = vmatpush1.bf16.msra.mxu0 %v452
        %473 = vmatprep.subr.bf16.mxu0 0
        %474 = vmatpush1.bf16.msra.mxu0 %v453
        %475 = vmatprep.subr.bf16.mxu0 0
        %476 = vmatpush1.bf16.msra.mxu0 %v454
        %477 = vmatprep.subr.bf16.mxu0 0
        %478 = vmatpush1.bf16.msra.mxu0 %v455
        %479 = vmatprep.subr.bf16.mxu0 0
        %480 = vmatpush1.bf16.msra.mxu0 %v456
        %481 = vmatprep.subr.bf16.mxu0 0
        %482 = vmatpush1.bf16.msra.mxu0 0
        %483 = vmatprep.subr.bf16.mxu0 0
        %484 = vmatpush1.bf16.msra.mxu0 0
        %485 = vmatprep.subr.bf16.mxu0 0
        %486 = vmatpush1.bf16.msra.mxu0 0
        %487 = vmatprep.subr.bf16.mxu0 0
        %488 = vmatpush1.bf16.msra.mxu0 0
        %489 = vmatprep.subr.bf16.mxu0 0
        %490 = vmatpush1.bf16.msra.mxu0 0
        %491 = vmatprep.subr.bf16.mxu0 0
        %492 = vmatpush1.bf16.msra.mxu0 0
        %493 = vmatprep.subr.bf16.mxu0 0
        %494 = vmatpush1.bf16.msra.mxu0 0
        %495 = vmatprep.subr.bf16.mxu0 0
        %496 = vmatpush1.bf16.msra.mxu0 0
        %497 = vmatprep.mubr.bf16.mxu0 0
        %498 = vmatmul.mubr.bf16.gmra.mrb[0].mxu0 %v401
        %v499 = vpop.f32.mrb[0].mxu0
        %v500 = vadd.f32 0.0, %v499
        %v501 = vpop.f32.mrb[0].mxu0
        %v502 = vpop.f32.mrb[0].mxu0
        %v503 = vadd.f32 0.0, %v502
        %v504 = vpop.f32.mrb[0].mxu0
        %505 = vmatprep.mubr.bf16.mxu0 0
        %506 = vmatmul.mubr.bf16.gmra.mrb[0].mxu0 %v402
        %v507 = vpop.f32.mrb[0].mxu0
        %v508 = vadd.f32 0.0, %v507
        %v509 = vpop.f32.mrb[0].mxu0
        %v510 = vpop.f32.mrb[0].mxu0
        %v511 = vadd.f32 0.0, %v510
        %v512 = vpop.f32.mrb[0].mxu0
        %513 = vmatprep.mubr.bf16.mxu0 0
        %514 = vmatmul.mubr.bf16.gmra.mrb[0].mxu0 %v403
        %v515 = vpop.f32.mrb[0].mxu0
        %v516 = vadd.f32 0.0, %v515
        %v517 = vpop.f32.mrb[0].mxu0
        %v518 = vpop.f32.mrb[0].mxu0
        %v519 = vadd.f32 0.0, %v518
        %v520 = vpop.f32.mrb[0].mxu0
        %521 = vmatprep.mubr.bf16.mxu0 0
        %522 = vmatmul.mubr.bf16.gmra.mrb[0].mxu0 %v404
        %v523 = vpop.f32.mrb[0].mxu0
        %v524 = vadd.f32 0.0, %v523
        %v525 = vpop.f32.mrb[0].mxu0
        %v526 = vpop.f32.mrb[0].mxu0
        %v527 = vadd.f32 0.0, %v526
        %v528 = vpop.f32.mrb[0].mxu0
        %529 = vmatprep.mubr.bf16.mxu0 0
        %530 = vmatmul.mubr.bf16.gmra.mrb[0].mxu0 %v405
        %v531 = vpop.f32.mrb[0].mxu0
        %v532 = vadd.f32 0.0, %v531
        %v533 = vpop.f32.mrb[0].mxu0
        %v534 = vpop.f32.mrb[0].mxu0
        %v535 = vadd.f32 0.0, %v534
        %v536 = vpop.f32.mrb[0].mxu0
        %537 = vmatprep.mubr.bf16.mxu0 0
        %538 = vmatmul.mubr.bf16.gmra.mrb[0].mxu0 %v406
        %v539 = vpop.f32.mrb[0].mxu0
        %v540 = vadd.f32 0.0, %v539
        %v541 = vpop.f32.mrb[0].mxu0
        %v542 = vpop.f32.mrb[0].mxu0
        %v543 = vadd.f32 0.0, %v542
        %v544 = vpop.f32.mrb[0].mxu0
        %545 = vmatprep.mubr.bf16.mxu0 0
        %546 = vmatmul.mubr.bf16.gmra.mrb[0].mxu0 %v407
        %v547 = vpop.f32.mrb[0].mxu0
        %v548 = vadd.f32 0.0, %v547
        %v549 = vpop.f32.mrb[0].mxu0
        %v550 = vpop.f32.mrb[0].mxu0
        %v551 = vadd.f32 0.0, %v550
        %v552 = vpop.f32.mrb[0].mxu0
        %553 = vmatprep.mubr.bf16.mxu0 0
        %554 = vmatmul.mubr.bf16.gmra.mrb[0].mxu0 %v408
        %v555 = vpop.f32.mrb[0].mxu0
        %v556 = vadd.f32 0.0, %v555
        %v557 = vpop.f32.mrb[0].mxu0
        %v558 = vpop.f32.mrb[0].mxu0
        %v559 = vadd.f32 0.0, %v558
        %v560 = vpop.f32.mrb[0].mxu0
        %561 = vdwg.mxu0
        %v562 = vpack.c.bf16 %v503, %v500
        %v563 = vpack.c.bf16 %v511, %v508
        %v564 = vpack.c.bf16 %v519, %v516
        %v565 = vpack.c.bf16 %v527, %v524
        %v566 = vpack.c.bf16 %v535, %v532
        %v567 = vpack.c.bf16 %v543, %v540
        %v568 = vpack.c.bf16 %v551, %v548
        %v569 = vpack.c.bf16 %v559, %v556
        %v570 = vld [vmem:[%s300] sm:$0xff]
        %v571 = vld [vmem:[%s300 + $0x8] sm:$0xf]
        %v574 = vunpack.c.l.b16 %v570
        %v575 = vunpack.c.h.b16 %v570
        %v576 = vunpack.c.l.b16 %v571
        %v577 = vpack.c.b16 %v574, %v574
        %v578 = vpack.c.b16 %v575, %v575
        %v579 = vpack.c.b16 %v576, %v576
        %vm580 = vcmask 64512
        %v582 = vsel %vm580, %v562, 0
        %v585 = vsel %vm580, %v563, 0
        %v588 = vsel %vm580, %v564, 0
        %v591 = vsel %vm580, %v565, 0
        %v594 = vsel %vm580, %v566, 0
        %v597 = vsel %vm580, %v567, 0
        %v600 = vsel %vm580, %v568, 0
        %v603 = vsel %vm580, %v569, 0
        %vm605 = vcmask 1043456
        %v607 = vsel %vm605, %v577, 0
        %v610 = vsel %vm605, %v578, 0
        %v613 = vsel %vm605, %v579, 0
        %615 = vmatprep.subr.bf16.mxu0 %v610
        %616 = vmatpush1.bf16.msra.mxu0 %v607
        %617 = vmatprep.subr.bf16.mxu0 0
        %618 = vmatpush1.bf16.msra.mxu0 0
        %619 = vmatprep.subr.bf16.mxu0 0
        %620 = vmatpush1.bf16.msra.mxu0 0
        %621 = vmatprep.subr.bf16.mxu0 0
        %622 = vmatpush1.bf16.msra.mxu0 0
        %623 = vmatprep.subr.bf16.mxu0 0
        %624 = vmatpush1.bf16.msra.mxu0 0
        %625 = vmatprep.subr.bf16.mxu0 0
        %626 = vmatpush1.bf16.msra.mxu0 0
        %627 = vmatprep.subr.bf16.mxu0 0
        %628 = vmatpush1.bf16.msra.mxu0 0
        %629 = vmatprep.subr.bf16.mxu0 0
        %630 = vmatpush1.bf16.msra.mxu0 0
        %631 = vmatprep.subr.bf16.mxu0 0
        %632 = vmatpush1.bf16.msra.mxu0 0
        %633 = vmatprep.subr.bf16.mxu0 0
        %634 = vmatpush1.bf16.msra.mxu0 0
        %635 = vmatprep.subr.bf16.mxu0 0
        %636 = vmatpush1.bf16.msra.mxu0 0
        %637 = vmatprep.subr.bf16.mxu0 0
        %638 = vmatpush1.bf16.msra.mxu0 0
        %639 = vmatprep.subr.bf16.mxu0 0
        %640 = vmatpush1.bf16.msra.mxu0 0
        %641 = vmatprep.subr.bf16.mxu0 0
        %642 = vmatpush1.bf16.msra.mxu0 0
        %643 = vmatprep.subr.bf16.mxu0 0
        %644 = vmatpush1.bf16.msra.mxu0 0
        %645 = vmatprep.subr.bf16.mxu0 0
        %646 = vmatpush1.bf16.msra.mxu0 0
        %647 = vmatprep.mubr.bf16.mxu0 0
        %648 = vmatmul.mubr.bf16.gmra.mrb[0].mxu0 %v582
        %v649 = vpop.f32.mrb[0].mxu0
        %v650 = vadd.f32 0.0, %v649
        %v651 = vpop.f32.mrb[0].mxu0
        %v652 = vadd.f32 0.0, %v651
        %v653 = vpop.f32.mrb[0].mxu0
        %v654 = vadd.f32 0.0, %v653
        %v655 = vpop.f32.mrb[0].mxu0
        %v656 = vadd.f32 0.0, %v655
        %657 = vmatprep.mubr.bf16.mxu0 0
        %658 = vmatmul.mubr.bf16.gmra.mrb[0].mxu0 %v585
        %v659 = vpop.f32.mrb[0].mxu0
        %v660 = vadd.f32 0.0, %v659
        %v661 = vpop.f32.mrb[0].mxu0
        %v662 = vadd.f32 0.0, %v661
        %v663 = vpop.f32.mrb[0].mxu0
        %v664 = vadd.f32 0.0, %v663
        %v665 = vpop.f32.mrb[0].mxu0
        %v666 = vadd.f32 0.0, %v665
        %667 = vmatprep.mubr.bf16.mxu0 0
        %668 = vmatmul.mubr.bf16.gmra.mrb[0].mxu0 %v588
        %v669 = vpop.f32.mrb[0].mxu0
        %v670 = vadd.f32 0.0, %v669
        %v671 = vpop.f32.mrb[0].mxu0
        %v672 = vadd.f32 0.0, %v671
        %v673 = vpop.f32.mrb[0].mxu0
        %v674 = vadd.f32 0.0, %v673
        %v675 = vpop.f32.mrb[0].mxu0
        %v676 = vadd.f32 0.0, %v675
        %677 = vmatprep.mubr.bf16.mxu0 0
        %678 = vmatmul.mubr.bf16.gmra.mrb[0].mxu0 %v591
        %v679 = vpop.f32.mrb[0].mxu0
        %v680 = vadd.f32 0.0, %v679
        %v681 = vpop.f32.mrb[0].mxu0
        %v682 = vadd.f32 0.0, %v681
        %v683 = vpop.f32.mrb[0].mxu0
        %v684 = vadd.f32 0.0, %v683
        %v685 = vpop.f32.mrb[0].mxu0
        %v686 = vadd.f32 0.0, %v685
        %687 = vmatprep.mubr.bf16.mxu0 0
        %688 = vmatmul.mubr.bf16.gmra.mrb[0].mxu0 %v594
        %v689 = vpop.f32.mrb[0].mxu0
        %v690 = vadd.f32 0.0, %v689
        %v691 = vpop.f32.mrb[0].mxu0
        %v692 = vadd.f32 0.0, %v691
        %v693 = vpop.f32.mrb[0].mxu0
        %v694 = vadd.f32 0.0, %v693
        %v695 = vpop.f32.mrb[0].mxu0
        %v696 = vadd.f32 0.0, %v695
        %697 = vmatprep.mubr.bf16.mxu0 0
        %698 = vmatmul.mubr.bf16.gmra.mrb[0].mxu0 %v597
        %v699 = vpop.f32.mrb[0].mxu0
        %v700 = vadd.f32 0.0, %v699
        %v701 = vpop.f32.mrb[0].mxu0
        %v702 = vadd.f32 0.0, %v701
        %v703 = vpop.f32.mrb[0].mxu0
        %v704 = vadd.f32 0.0, %v703
        %v705 = vpop.f32.mrb[0].mxu0
        %v706 = vadd.f32 0.0, %v705
        %707 = vmatprep.mubr.bf16.mxu0 0
        %708 = vmatmul.mubr.bf16.gmra.mrb[0].mxu0 %v600
        %v709 = vpop.f32.mrb[0].mxu0
        %v710 = vadd.f32 0.0, %v709
        %v711 = vpop.f32.mrb[0].mxu0
        %v712 = vadd.f32 0.0, %v711
        %v713 = vpop.f32.mrb[0].mxu0
        %v714 = vadd.f32 0.0, %v713
        %v715 = vpop.f32.mrb[0].mxu0
        %v716 = vadd.f32 0.0, %v715
        %717 = vmatprep.mubr.bf16.mxu0 0
        %718 = vmatmul.mubr.bf16.gmra.mrb[0].mxu0 %v603
        %v719 = vpop.f32.mrb[0].mxu0
        %v720 = vadd.f32 0.0, %v719
        %v721 = vpop.f32.mrb[0].mxu0
        %v722 = vadd.f32 0.0, %v721
        %v723 = vpop.f32.mrb[0].mxu0
        %v724 = vadd.f32 0.0, %v723
        %v725 = vpop.f32.mrb[0].mxu0
        %v726 = vadd.f32 0.0, %v725
        %727 = vdwg.mxu0
        %728 = vmatprep.subr.bf16.mxu0 0
        %729 = vmatpush1.bf16.msra.mxu0 %v613
        %730 = vmatprep.subr.bf16.mxu0 0
        %731 = vmatpush1.bf16.msra.mxu0 0
        %732 = vmatprep.subr.bf16.mxu0 0
        %733 = vmatpush1.bf16.msra.mxu0 0
        %734 = vmatprep.subr.bf16.mxu0 0
        %735 = vmatpush1.bf16.msra.mxu0 0
        %736 = vmatprep.subr.bf16.mxu0 0
        %737 = vmatpush1.bf16.msra.mxu0 0
        %738 = vmatprep.subr.bf16.mxu0 0
        %739 = vmatpush1.bf16.msra.mxu0 0
        %740 = vmatprep.subr.bf16.mxu0 0
        %741 = vmatpush1.bf16.msra.mxu0 0
        %742 = vmatprep.subr.bf16.mxu0 0
        %743 = vmatpush1.bf16.msra.mxu0 0
        %744 = vmatprep.subr.bf16.mxu0 0
        %745 = vmatpush1.bf16.msra.mxu0 0
        %746 = vmatprep.subr.bf16.mxu0 0
        %747 = vmatpush1.bf16.msra.mxu0 0
        %748 = vmatprep.subr.bf16.mxu0 0
        %749 = vmatpush1.bf16.msra.mxu0 0
        %750 = vmatprep.subr.bf16.mxu0 0
        %751 = vmatpush1.bf16.msra.mxu0 0
        %752 = vmatprep.subr.bf16.mxu0 0
        %753 = vmatpush1.bf16.msra.mxu0 0
        %754 = vmatprep.subr.bf16.mxu0 0
        %755 = vmatpush1.bf16.msra.mxu0 0
        %756 = vmatprep.subr.bf16.mxu0 0
        %757 = vmatpush1.bf16.msra.mxu0 0
        %758 = vmatprep.subr.bf16.mxu0 0
        %759 = vmatpush1.bf16.msra.mxu0 0
        %760 = vmatprep.mubr.bf16.mxu0 0
        %761 = vmatmul.mubr.bf16.gmra.mrb[0].mxu0 %v582
        %v762 = vpop.f32.mrb[0].mxu0
        %v763 = vadd.f32 0.0, %v762
        %v764 = vpop.f32.mrb[0].mxu0
        %v765 = vpop.f32.mrb[0].mxu0
        %v766 = vadd.f32 0.0, %v765
        %v767 = vpop.f32.mrb[0].mxu0
        %768 = vmatprep.mubr.bf16.mxu0 0
        %769 = vmatmul.mubr.bf16.gmra.mrb[0].mxu0 %v585
        %v770 = vpop.f32.mrb[0].mxu0
        %v771 = vadd.f32 0.0, %v770
        %v772 = vpop.f32.mrb[0].mxu0
        %v773 = vpop.f32.mrb[0].mxu0
        %v774 = vadd.f32 0.0, %v773
        %v775 = vpop.f32.mrb[0].mxu0
        %776 = vmatprep.mubr.bf16.mxu0 0
        %777 = vmatmul.mubr.bf16.gmra.mrb[0].mxu0 %v588
        %v778 = vpop.f32.mrb[0].mxu0
        %v779 = vadd.f32 0.0, %v778
        %v780 = vpop.f32.mrb[0].mxu0
        %v781 = vpop.f32.mrb[0].mxu0
        %v782 = vadd.f32 0.0, %v781
        %v783 = vpop.f32.mrb[0].mxu0
        %784 = vmatprep.mubr.bf16.mxu0 0
        %785 = vmatmul.mubr.bf16.gmra.mrb[0].mxu0 %v591
        %v786 = vpop.f32.mrb[0].mxu0
        %v787 = vadd.f32 0.0, %v786
        %v788 = vpop.f32.mrb[0].mxu0
        %v789 = vpop.f32.mrb[0].mxu0
        %v790 = vadd.f32 0.0, %v789
        %v791 = vpop.f32.mrb[0].mxu0
        %792 = vmatprep.mubr.bf16.mxu0 0
        %793 = vmatmul.mubr.bf16.gmra.mrb[0].mxu0 %v594
        %v794 = vpop.f32.mrb[0].mxu0
        %v795 = vadd.f32 0.0, %v794
        %v796 = vpop.f32.mrb[0].mxu0
        %v797 = vpop.f32.mrb[0].mxu0
        %v798 = vadd.f32 0.0, %v797
        %v799 = vpop.f32.mrb[0].mxu0
        %800 = vmatprep.mubr.bf16.mxu0 0
        %801 = vmatmul.mubr.bf16.gmra.mrb[0].mxu0 %v597
        %v802 = vpop.f32.mrb[0].mxu0
        %v803 = vadd.f32 0.0, %v802
        %v804 = vpop.f32.mrb[0].mxu0
        %v805 = vpop.f32.mrb[0].mxu0
        %v806 = vadd.f32 0.0, %v805
        %v807 = vpop.f32.mrb[0].mxu0
        %808 = vmatprep.mubr.bf16.mxu0 0
        %809 = vmatmul.mubr.bf16.gmra.mrb[0].mxu0 %v600
        %v810 = vpop.f32.mrb[0].mxu0
        %v811 = vadd.f32 0.0, %v810
        %v812 = vpop.f32.mrb[0].mxu0
        %v813 = vpop.f32.mrb[0].mxu0
        %v814 = vadd.f32 0.0, %v813
        %v815 = vpop.f32.mrb[0].mxu0
        %816 = vmatprep.mubr.bf16.mxu0 0
        %817 = vmatmul.mubr.bf16.gmra.mrb[0].mxu0 %v603
        %v818 = vpop.f32.mrb[0].mxu0
        %v819 = vadd.f32 0.0, %v818
        %v820 = vpop.f32.mrb[0].mxu0
        %v821 = vpop.f32.mrb[0].mxu0
        %v822 = vadd.f32 0.0, %v821
        %v823 = vpop.f32.mrb[0].mxu0
        %824 = vdwg.mxu0
        %v825 = vld [vmem:[%s294] sm:$0x7]
        %v827 = vlaneseq
        %v828 = vshrl.u32 %v827, 7
        %v829 = vsub.s32 0, %v828
        %v830 = vrot.slane %v825, %v829
        %v831 = vlaneseq
        %v832 = vshrl.u32 %v831, 7
        %v833 = vsub.s32 1, %v832
        %v834 = vrot.slane %v825, %v833
        %v835 = vlaneseq
        %v836 = vshrl.u32 %v835, 7
        %v837 = vsub.s32 2, %v836
        %v838 = vrot.slane %v825, %v837
        %v874 = vunpack.c.l.b16 %v321
        %v875 = vunpack.c.h.b16 %v321
        %v876 = vunpack.c.l.b16 %v322
        %v877 = vunpack.c.l.b16 %v323
        %v878 = vunpack.c.h.b16 %v323
        %v879 = vunpack.c.l.b16 %v324
        %v880 = vunpack.c.l.b16 %v325
        %v881 = vunpack.c.h.b16 %v325
        %v882 = vunpack.c.l.b16 %v326
        %v883 = vunpack.c.l.b16 %v327
        %v884 = vunpack.c.h.b16 %v327
        %v885 = vunpack.c.l.b16 %v328
        %v886 = vunpack.c.l.b16 %v329
        %v887 = vunpack.c.h.b16 %v329
        %v888 = vunpack.c.l.b16 %v330
        %v889 = vunpack.c.l.b16 %v331
        %v890 = vunpack.c.h.b16 %v331
        %v891 = vunpack.c.l.b16 %v332
        %v892 = vunpack.c.l.b16 %v333
        %v893 = vunpack.c.h.b16 %v333
        %v894 = vunpack.c.l.b16 %v334
        %v895 = vunpack.c.l.b16 %v335
        %v896 = vunpack.c.h.b16 %v335
        %v897 = vunpack.c.l.b16 %v336
        %v898 = vunpack.c.l.b16 %v337
        %v899 = vunpack.c.h.b16 %v337
        %v900 = vunpack.c.l.b16 %v338
        %v901 = vunpack.c.l.b16 %v339
        %v902 = vunpack.c.h.b16 %v339
        %v903 = vunpack.c.l.b16 %v340
        %v904 = vunpack.c.l.b16 %v341
        %v905 = vunpack.c.h.b16 %v341
        %v906 = vunpack.c.l.b16 %v342
        %v907 = vunpack.c.l.b16 %v343
        %v908 = vunpack.c.h.b16 %v343
        %v909 = vunpack.c.l.b16 %v344
        %v910 = vunpack.c.l.b16 %v345
        %v911 = vunpack.c.h.b16 %v345
        %v912 = vunpack.c.l.b16 %v346
        %v913 = vunpack.c.l.b16 %v347
        %v914 = vunpack.c.h.b16 %v347
        %v915 = vunpack.c.l.b16 %v348
        %v916 = vunpack.c.l.b16 %v349
        %v917 = vunpack.c.h.b16 %v349
        %v918 = vunpack.c.l.b16 %v350
        %v919 = vunpack.c.l.b16 %v351
        %v920 = vunpack.c.h.b16 %v351
        %v921 = vunpack.c.l.b16 %v352
        %v922 = vpack.c.b16 %v877, %v874
        %v923 = vpack.c.b16 %v878, %v875
        %v924 = vpack.c.b16 %v879, %v876
        %v925 = vpack.c.b16 %v883, %v880
        %v926 = vpack.c.b16 %v884, %v881
        %v927 = vpack.c.b16 %v885, %v882
        %v928 = vpack.c.b16 %v889, %v886
        %v929 = vpack.c.b16 %v890, %v887
        %v930 = vpack.c.b16 %v891, %v888
        %v931 = vpack.c.b16 %v895, %v892
        %v932 = vpack.c.b16 %v896, %v893
        %v933 = vpack.c.b16 %v897, %v894
        %v934 = vpack.c.b16 %v901, %v898
        %v935 = vpack.c.b16 %v902, %v899
        %v936 = vpack.c.b16 %v903, %v900
        %v937 = vpack.c.b16 %v907, %v904
        %v938 = vpack.c.b16 %v908, %v905
        %v939 = vpack.c.b16 %v909, %v906
        %v940 = vpack.c.b16 %v913, %v910
        %v941 = vpack.c.b16 %v914, %v911
        %v942 = vpack.c.b16 %v915, %v912
        %v943 = vpack.c.b16 %v919, %v916
        %v944 = vpack.c.b16 %v920, %v917
        %v945 = vpack.c.b16 %v921, %v918
        %970 = vmatprep.subr.bf16.mxu0 %v923
        %971 = vmatpush1.bf16.msra.mxu0 %v922
        %972 = vmatprep.subr.bf16.mxu0 %v926
        %973 = vmatpush1.bf16.msra.mxu0 %v925
        %974 = vmatprep.subr.bf16.mxu0 %v929
        %975 = vmatpush1.bf16.msra.mxu0 %v928
        %976 = vmatprep.subr.bf16.mxu0 %v932
        %977 = vmatpush1.bf16.msra.mxu0 %v931
        %978 = vmatprep.subr.bf16.mxu0 %v935
        %979 = vmatpush1.bf16.msra.mxu0 %v934
        %980 = vmatprep.subr.bf16.mxu0 %v938
        %981 = vmatpush1.bf16.msra.mxu0 %v937
        %982 = vmatprep.subr.bf16.mxu0 %v941
        %983 = vmatpush1.bf16.msra.mxu0 %v940
        %984 = vmatprep.subr.bf16.mxu0 %v944
        %985 = vmatpush1.bf16.msra.mxu0 %v943
        %986 = vmatprep.subr.bf16.mxu0 0
        %987 = vmatpush1.bf16.msra.mxu0 0
        %988 = vmatprep.subr.bf16.mxu0 0
        %989 = vmatpush1.bf16.msra.mxu0 0
        %990 = vmatprep.subr.bf16.mxu0 0
        %991 = vmatpush1.bf16.msra.mxu0 0
        %992 = vmatprep.subr.bf16.mxu0 0
        %993 = vmatpush1.bf16.msra.mxu0 0
        %994 = vmatprep.subr.bf16.mxu0 0
        %995 = vmatpush1.bf16.msra.mxu0 0
        %996 = vmatprep.subr.bf16.mxu0 0
        %997 = vmatpush1.bf16.msra.mxu0 0
        %998 = vmatprep.subr.bf16.mxu0 0
        %999 = vmatpush1.bf16.msra.mxu0 0
        %1000 = vmatprep.subr.bf16.mxu0 0
        %1001 = vmatpush1.bf16.msra.mxu0 0
        %1002 = vmatprep.mubr.bf16.mxu0 0
        %1003 = vmatmul.mubr.bf16.gmra.mrb[0].mxu0 %v401
        %v1004 = vpop.f32.mrb[0].mxu0
        %v1005 = vadd.f32 %v830, %v1004
        %v1006 = vpop.f32.mrb[0].mxu0
        %v1007 = vadd.f32 %v834, %v1006
        %v1008 = vpop.f32.mrb[0].mxu0
        %v1009 = vadd.f32 %v830, %v1008
        %v1010 = vpop.f32.mrb[0].mxu0
        %v1011 = vadd.f32 %v834, %v1010
        %1012 = vmatprep.mubr.bf16.mxu0 0
        %1013 = vmatmul.mubr.bf16.gmra.mrb[0].mxu0 %v402
        %v1014 = vpop.f32.mrb[0].mxu0
        %v1015 = vadd.f32 %v830, %v1014
        %v1016 = vpop.f32.mrb[0].mxu0
        %v1017 = vadd.f32 %v834, %v1016
        %v1018 = vpop.f32.mrb[0].mxu0
        %v1019 = vadd.f32 %v830, %v1018
        %v1020 = vpop.f32.mrb[0].mxu0
        %v1021 = vadd.f32 %v834, %v1020
        %1022 = vmatprep.mubr.bf16.mxu0 0
        %1023 = vmatmul.mubr.bf16.gmra.mrb[0].mxu0 %v403
        %v1024 = vpop.f32.mrb[0].mxu0
        %v1025 = vadd.f32 %v830, %v1024
        %v1026 = vpop.f32.mrb[0].mxu0
        %v1027 = vadd.f32 %v834, %v1026
        %v1028 = vpop.f32.mrb[0].mxu0
        %v1029 = vadd.f32 %v830, %v1028
        %v1030 = vpop.f32.mrb[0].mxu0
        %v1031 = vadd.f32 %v834, %v1030
        %1032 = vmatprep.mubr.bf16.mxu0 0
        %1033 = vmatmul.mubr.bf16.gmra.mrb[0].mxu0 %v404
        %v1034 = vpop.f32.mrb[0].mxu0
        %v1035 = vadd.f32 %v830, %v1034
        %v1036 = vpop.f32.mrb[0].mxu0
        %v1037 = vadd.f32 %v834, %v1036
        %v1038 = vpop.f32.mrb[0].mxu0
        %v1039 = vadd.f32 %v830, %v1038
        %v1040 = vpop.f32.mrb[0].mxu0
        %v1041 = vadd.f32 %v834, %v1040
        %1042 = vmatprep.mubr.bf16.mxu0 0
        %1043 = vmatmul.mubr.bf16.gmra.mrb[0].mxu0 %v405
        %v1044 = vpop.f32.mrb[0].mxu0
        %v1045 = vadd.f32 %v830, %v1044
        %v1046 = vpop.f32.mrb[0].mxu0
        %v1047 = vadd.f32 %v834, %v1046
        %v1048 = vpop.f32.mrb[0].mxu0
        %v1049 = vadd.f32 %v830, %v1048
        %v1050 = vpop.f32.mrb[0].mxu0
        %v1051 = vadd.f32 %v834, %v1050
        %1052 = vmatprep.mubr.bf16.mxu0 0
        %1053 = vmatmul.mubr.bf16.gmra.mrb[0].mxu0 %v406
        %v1054 = vpop.f32.mrb[0].mxu0
        %v1055 = vadd.f32 %v830, %v1054
        %v1056 = vpop.f32.mrb[0].mxu0
        %v1057 = vadd.f32 %v834, %v1056
        %v1058 = vpop.f32.mrb[0].mxu0
        %v1059 = vadd.f32 %v830, %v1058
        %v1060 = vpop.f32.mrb[0].mxu0
        %v1061 = vadd.f32 %v834, %v1060
        %1062 = vmatprep.mubr.bf16.mxu0 0
        %1063 = vmatmul.mubr.bf16.gmra.mrb[0].mxu0 %v407
        %v1064 = vpop.f32.mrb[0].mxu0
        %v1065 = vadd.f32 %v830, %v1064
        %v1066 = vpop.f32.mrb[0].mxu0
        %v1067 = vadd.f32 %v834, %v1066
        %v1068 = vpop.f32.mrb[0].mxu0
        %v1069 = vadd.f32 %v830, %v1068
        %v1070 = vpop.f32.mrb[0].mxu0
        %v1071 = vadd.f32 %v834, %v1070
        %1072 = vmatprep.mubr.bf16.mxu0 0
        %1073 = vmatmul.mubr.bf16.gmra.mrb[0].mxu0 %v408
        %v1074 = vpop.f32.mrb[0].mxu0
        %v1075 = vadd.f32 %v830, %v1074
        %v1076 = vpop.f32.mrb[0].mxu0
        %v1077 = vadd.f32 %v834, %v1076
        %v1078 = vpop.f32.mrb[0].mxu0
        %v1079 = vadd.f32 %v830, %v1078
        %v1080 = vpop.f32.mrb[0].mxu0
        %v1081 = vadd.f32 %v834, %v1080
        %1082 = vdwg.mxu0
        %1083 = vmatprep.subr.bf16.mxu0 0
        %1084 = vmatpush1.bf16.msra.mxu0 %v924
        %1085 = vmatprep.subr.bf16.mxu0 0
        %1086 = vmatpush1.bf16.msra.mxu0 %v927
        %1087 = vmatprep.subr.bf16.mxu0 0
        %1088 = vmatpush1.bf16.msra.mxu0 %v930
        %1089 = vmatprep.subr.bf16.mxu0 0
        %1090 = vmatpush1.bf16.msra.mxu0 %v933
        %1091 = vmatprep.subr.bf16.mxu0 0
        %1092 = vmatpush1.bf16.msra.mxu0 %v936
        %1093 = vmatprep.subr.bf16.mxu0 0
        %1094 = vmatpush1.bf16.msra.mxu0 %v939
        %1095 = vmatprep.subr.bf16.mxu0 0
        %1096 = vmatpush1.bf16.msra.mxu0 %v942
        %1097 = vmatprep.subr.bf16.mxu0 0
        %1098 = vmatpush1.bf16.msra.mxu0 %v945
        %1099 = vmatprep.subr.bf16.mxu0 0
        %1100 = vmatpush1.bf16.msra.mxu0 0
        %1101 = vmatprep.subr.bf16.mxu0 0
        %1102 = vmatpush1.bf16.msra.mxu0 0
        %1103 = vmatprep.subr.bf16.mxu0 0
        %1104 = vmatpush1.bf16.msra.mxu0 0
        %1105 = vmatprep.subr.bf16.mxu0 0
        %1106 = vmatpush1.bf16.msra.mxu0 0
        %1107 = vmatprep.subr.bf16.mxu0 0
        %1108 = vmatpush1.bf16.msra.mxu0 0
        %1109 = vmatprep.subr.bf16.mxu0 0
        %1110 = vmatpush1.bf16.msra.mxu0 0
        %1111 = vmatprep.subr.bf16.mxu0 0
        %1112 = vmatpush1.bf16.msra.mxu0 0
        %1113 = vmatprep.subr.bf16.mxu0 0
        %1114 = vmatpush1.bf16.msra.mxu0 0
        %1115 = vmatprep.mubr.bf16.mxu0 0
        %1116 = vmatmul.mubr.bf16.gmra.mrb[0].mxu0 %v401
        %v1117 = vpop.f32.mrb[0].mxu0
        %v1118 = vadd.f32 %v838, %v1117
        %v1119 = vpop.f32.mrb[0].mxu0
        %v1120 = vpop.f32.mrb[0].mxu0
        %v1121 = vadd.f32 %v838, %v1120
        %v1122 = vpop.f32.mrb[0].mxu0
        %1123 = vmatprep.mubr.bf16.mxu0 0
        %1124 = vmatmul.mubr.bf16.gmra.mrb[0].mxu0 %v402
        %v1125 = vpop.f32.mrb[0].mxu0
        %v1126 = vadd.f32 %v838, %v1125
        %v1127 = vpop.f32.mrb[0].mxu0
        %v1128 = vpop.f32.mrb[0].mxu0
        %v1129 = vadd.f32 %v838, %v1128
        %v1130 = vpop.f32.mrb[0].mxu0
        %1131 = vmatprep.mubr.bf16.mxu0 0
        %1132 = vmatmul.mubr.bf16.gmra.mrb[0].mxu0 %v403
        %v1133 = vpop.f32.mrb[0].mxu0
        %v1134 = vadd.f32 %v838, %v1133
        %v1135 = vpop.f32.mrb[0].mxu0
        %v1136 = vpop.f32.mrb[0].mxu0
        %v1137 = vadd.f32 %v838, %v1136
        %v1138 = vpop.f32.mrb[0].mxu0
        %1139 = vmatprep.mubr.bf16.mxu0 0
        %1140 = vmatmul.mubr.bf16.gmra.mrb[0].mxu0 %v404
        %v1141 = vpop.f32.mrb[0].mxu0
        %v1142 = vadd.f32 %v838, %v1141
        %v1143 = vpop.f32.mrb[0].mxu0
        %v1144 = vpop.f32.mrb[0].mxu0
        %v1145 = vadd.f32 %v838, %v1144
        %v1146 = vpop.f32.mrb[0].mxu0
        %1147 = vmatprep.mubr.bf16.mxu0 0
        %1148 = vmatmul.mubr.bf16.gmra.mrb[0].mxu0 %v405
        %v1149 = vpop.f32.mrb[0].mxu0
        %v1150 = vadd.f32 %v838, %v1149
        %v1151 = vpop.f32.mrb[0].mxu0
        %v1152 = vpop.f32.mrb[0].mxu0
        %v1153 = vadd.f32 %v838, %v1152
        %v1154 = vpop.f32.mrb[0].mxu0
        %1155 = vmatprep.mubr.bf16.mxu0 0
        %1156 = vmatmul.mubr.bf16.gmra.mrb[0].mxu0 %v406
        %v1157 = vpop.f32.mrb[0].mxu0
        %v1158 = vadd.f32 %v838, %v1157
        %v1159 = vpop.f32.mrb[0].mxu0
        %v1160 = vpop.f32.mrb[0].mxu0
        %v1161 = vadd.f32 %v838, %v1160
        %v1162 = vpop.f32.mrb[0].mxu0
        %1163 = vmatprep.mubr.bf16.mxu0 0
        %1164 = vmatmul.mubr.bf16.gmra.mrb[0].mxu0 %v407
        %v1165 = vpop.f32.mrb[0].mxu0
        %v1166 = vadd.f32 %v838, %v1165
        %v1167 = vpop.f32.mrb[0].mxu0
        %v1168 = vpop.f32.mrb[0].mxu0
        %v1169 = vadd.f32 %v838, %v1168
        %v1170 = vpop.f32.mrb[0].mxu0
        %1171 = vmatprep.mubr.bf16.mxu0 0
        %1172 = vmatmul.mubr.bf16.gmra.mrb[0].mxu0 %v408
        %v1173 = vpop.f32.mrb[0].mxu0
        %v1174 = vadd.f32 %v838, %v1173
        %v1175 = vpop.f32.mrb[0].mxu0
        %v1176 = vpop.f32.mrb[0].mxu0
        %v1177 = vadd.f32 %v838, %v1176
        %v1178 = vpop.f32.mrb[0].mxu0
        %1179 = vdwg.mxu0
        %v1180 = vmul.f32 %v650, 0.9999975
        %v1181 = vmul.f32 %v652, 0.9999975
        %v1182 = vmul.f32 %v763, 0.9999975
        %v1183 = vmul.f32 %v654, 0.9999975
        %v1184 = vmul.f32 %v656, 0.9999975
        %v1185 = vmul.f32 %v766, 0.9999975
        %v1186 = vmul.f32 %v660, 0.9999975
        %v1187 = vmul.f32 %v662, 0.9999975
        %v1188 = vmul.f32 %v771, 0.9999975
        %v1189 = vmul.f32 %v664, 0.9999975
        %v1190 = vmul.f32 %v666, 0.9999975
        %v1191 = vmul.f32 %v774, 0.9999975
        %v1192 = vmul.f32 %v670, 0.9999975
        %v1193 = vmul.f32 %v672, 0.9999975
        %v1194 = vmul.f32 %v779, 0.9999975
        %v1195 = vmul.f32 %v674, 0.9999975
        %v1196 = vmul.f32 %v676, 0.9999975
        %v1197 = vmul.f32 %v782, 0.9999975
        %v1198 = vmul.f32 %v680, 0.9999975
        %v1199 = vmul.f32 %v682, 0.9999975
        %v1200 = vmul.f32 %v787, 0.9999975
        %v1201 = vmul.f32 %v684, 0.9999975
        %v1202 = vmul.f32 %v686, 0.9999975
        %v1203 = vmul.f32 %v790, 0.9999975
        %v1204 = vmul.f32 %v690, 0.9999975
        %v1205 = vmul.f32 %v692, 0.9999975
        %v1206 = vmul.f32 %v795, 0.9999975
        %v1207 = vmul.f32 %v694, 0.9999975
        %v1208 = vmul.f32 %v696, 0.9999975
        %v1209 = vmul.f32 %v798, 0.9999975
        %v1210 = vmul.f32 %v700, 0.9999975
        %v1211 = vmul.f32 %v702, 0.9999975
        %v1212 = vmul.f32 %v803, 0.9999975
        %v1213 = vmul.f32 %v704, 0.9999975
        %v1214 = vmul.f32 %v706, 0.9999975
        %v1215 = vmul.f32 %v806, 0.9999975
        %v1216 = vmul.f32 %v710, 0.9999975
        %v1217 = vmul.f32 %v712, 0.9999975
        %v1218 = vmul.f32 %v811, 0.9999975
        %v1219 = vmul.f32 %v714, 0.9999975
        %v1220 = vmul.f32 %v716, 0.9999975
        %v1221 = vmul.f32 %v814, 0.9999975
        %v1222 = vmul.f32 %v720, 0.9999975
        %v1223 = vmul.f32 %v722, 0.9999975
        %v1224 = vmul.f32 %v819, 0.9999975
        %v1225 = vmul.f32 %v724, 0.9999975
        %v1226 = vmul.f32 %v726, 0.9999975
        %v1227 = vmul.f32 %v822, 0.9999975
        %v1228 = vadd.f32 %v1005, %v1180
        %v1229 = vadd.f32 %v1007, %v1181
        %v1230 = vadd.f32 %v1118, %v1182
        %v1231 = vadd.f32 %v1009, %v1183
        %v1232 = vadd.f32 %v1011, %v1184
        %v1233 = vadd.f32 %v1121, %v1185
        %v1234 = vadd.f32 %v1015, %v1186
        %v1235 = vadd.f32 %v1017, %v1187
        %v1236 = vadd.f32 %v1126, %v1188
        %v1237 = vadd.f32 %v1019, %v1189
        %v1238 = vadd.f32 %v1021, %v1190
        %v1239 = vadd.f32 %v1129, %v1191
        %v1240 = vadd.f32 %v1025, %v1192
        %v1241 = vadd.f32 %v1027, %v1193
        %v1242 = vadd.f32 %v1134, %v1194
        %v1243 = vadd.f32 %v1029, %v1195
        %v1244 = vadd.f32 %v1031, %v1196
        %v1245 = vadd.f32 %v1137, %v1197
        %v1246 = vadd.f32 %v1035, %v1198
        %v1247 = vadd.f32 %v1037, %v1199
        %v1248 = vadd.f32 %v1142, %v1200
        %v1249 = vadd.f32 %v1039, %v1201
        %v1250 = vadd.f32 %v1041, %v1202
        %v1251 = vadd.f32 %v1145, %v1203
        %v1252 = vadd.f32 %v1045, %v1204
        %v1253 = vadd.f32 %v1047, %v1205
        %v1254 = vadd.f32 %v1150, %v1206
        %v1255 = vadd.f32 %v1049, %v1207
        %v1256 = vadd.f32 %v1051, %v1208
        %v1257 = vadd.f32 %v1153, %v1209
        %v1258 = vadd.f32 %v1055, %v1210
        %v1259 = vadd.f32 %v1057, %v1211
        %v1260 = vadd.f32 %v1158, %v1212
        %v1261 = vadd.f32 %v1059, %v1213
        %v1262 = vadd.f32 %v1061, %v1214
        %v1263 = vadd.f32 %v1161, %v1215
        %v1264 = vadd.f32 %v1065, %v1216
        %v1265 = vadd.f32 %v1067, %v1217
        %v1266 = vadd.f32 %v1166, %v1218
        %v1267 = vadd.f32 %v1069, %v1219
        %v1268 = vadd.f32 %v1071, %v1220
        %v1269 = vadd.f32 %v1169, %v1221
        %v1270 = vadd.f32 %v1075, %v1222
        %v1271 = vadd.f32 %v1077, %v1223
        %v1272 = vadd.f32 %v1174, %v1224
        %v1273 = vadd.f32 %v1079, %v1225
        %v1274 = vadd.f32 %v1081, %v1226
        %v1275 = vadd.f32 %v1177, %v1227
        %1276 = vst [vmem:[%s278] sm:$0xff] %v1228
        %1277 = vst [vmem:[%s278 + $0x8] sm:$0xff] %v1229
        %1278 = vst [vmem:[%s278 + $0x10] sm:$0xff] %v1230
        %1279 = vst [vmem:[%s278 + $0x18] sm:$0xff] %v1231
        %1280 = vst [vmem:[%s278 + $0x20] sm:$0xff] %v1232
        %1281 = vst [vmem:[%s278 + $0x28] sm:$0xff] %v1233
        %1282 = vst [vmem:[%s278 + $0x30] sm:$0xff] %v1234
        %1283 = vst [vmem:[%s278 + $0x38] sm:$0xff] %v1235
        %1284 = vst [vmem:[%s278 + $0x40] sm:$0xff] %v1236
        %1285 = vst [vmem:[%s278 + $0x48] sm:$0xff] %v1237
        %1286 = vst [vmem:[%s278 + $0x50] sm:$0xff] %v1238
        %1287 = vst [vmem:[%s278 + $0x58] sm:$0xff] %v1239
        %1288 = vst [vmem:[%s278 + $0x60] sm:$0xff] %v1240
        %1289 = vst [vmem:[%s278 + $0x68] sm:$0xff] %v1241
        %1290 = vst [vmem:[%s278 + $0x70] sm:$0xff] %v1242
        %1291 = vst [vmem:[%s278 + $0x78] sm:$0xff] %v1243
        %1292 = vst [vmem:[%s278 + $0x80] sm:$0xff] %v1244
        %1293 = vst [vmem:[%s278 + $0x88] sm:$0xff] %v1245
        %1294 = vst [vmem:[%s278 + $0x90] sm:$0xff] %v1246
        %1295 = vst [vmem:[%s278 + $0x98] sm:$0xff] %v1247
        %1296 = vst [vmem:[%s278 + $0xa0] sm:$0xff] %v1248
        %1297 = vst [vmem:[%s278 + $0xa8] sm:$0xff] %v1249
        %1298 = vst [vmem:[%s278 + $0xb0] sm:$0xff] %v1250
        %1299 = vst [vmem:[%s278 + $0xb8] sm:$0xff] %v1251
        %1300 = vst [vmem:[%s278 + $0xc0] sm:$0xff] %v1252
        %1301 = vst [vmem:[%s278 + $0xc8] sm:$0xff] %v1253
        %1302 = vst [vmem:[%s278 + $0xd0] sm:$0xff] %v1254
        %1303 = vst [vmem:[%s278 + $0xd8] sm:$0xff] %v1255
        %1304 = vst [vmem:[%s278 + $0xe0] sm:$0xff] %v1256
        %1305 = vst [vmem:[%s278 + $0xe8] sm:$0xff] %v1257
        %1306 = vst [vmem:[%s278 + $0xf0] sm:$0xff] %v1258
        %1307 = vst [vmem:[%s278 + $0xf8] sm:$0xff] %v1259
        %1308 = vst [vmem:[%s278 + $0x100] sm:$0xff] %v1260
        %1309 = vst [vmem:[%s278 + $0x108] sm:$0xff] %v1261
        %1310 = vst [vmem:[%s278 + $0x110] sm:$0xff] %v1262
        %1311 = vst [vmem:[%s278 + $0x118] sm:$0xff] %v1263
        %1312 = vst [vmem:[%s278 + $0x120] sm:$0xff] %v1264
        %1313 = vst [vmem:[%s278 + $0x128] sm:$0xff] %v1265
        %1314 = vst [vmem:[%s278 + $0x130] sm:$0xff] %v1266
        %1315 = vst [vmem:[%s278 + $0x138] sm:$0xff] %v1267
        %1316 = vst [vmem:[%s278 + $0x140] sm:$0xff] %v1268
        %1317 = vst [vmem:[%s278 + $0x148] sm:$0xff] %v1269
        %1318 = vst [vmem:[%s278 + $0x150] sm:$0xff] %v1270
        %1319 = vst [vmem:[%s278 + $0x158] sm:$0xff] %v1271
        %1320 = vst [vmem:[%s278 + $0x160] sm:$0xff] %v1272
        %1321 = vst [vmem:[%s278 + $0x168] sm:$0xff] %v1273
        %1322 = vst [vmem:[%s278 + $0x170] sm:$0xff] %v1274
        %1323 = vst [vmem:[%s278 + $0x178] sm:$0xff] %v1275
        %s1324 = sand.u32 %s166, 1
        %s1325 = scalar_lea.sflag [#allocation3], %s1324
        %s1326 = sand.u32 %s166, 1
        %s1327 = smul.addr %s1326, 384
        %s1328 = scalar_lea.vmem [#allocation2], %s1327
        // Predicated region
        $region41: #{incre_lora_qkv.1} parent=39 // pred_check
          %p1329 = pneg %p176
        $region42: #{incre_lora_qkv.1} parent=39 // pred_check_branch
          %1331 = sbr.rel (%p1329) target = $region44
        $region43: #{incre_lora_qkv.1} parent=39 // pred_region
          %s1332 = smul.u32 16, %s23
          %s1333 = smul.u32 3, %s24
          %s1335 = ssub.s32 6144, 6144
          %1336 = vsyncadd %s1325, %s1335
          %s1337 = smul.addr %s1332, 3
          %s1338 = sadd.s32 %s1333, %s1337
          %s1339 = smul.addr %s1338, 128
          %s1340 = scalar_lea.hbm %s5, %s1339
          %s1341 = sshll.u32 %s1328, 4
          %s1342 = int_to_ptr.vmem [resolvable:$true] %s1341
          %1347 = dma.vmem_to_hbm [thread:$0]  %s1342, 6144, %s1340, %s1325, 384, 384, 24
        $region44: #{incre_lora_qkv.1} parent=39 // pred_fallthru
          _
      $region40: #{incre_lora_qkv.1} parent=5 // pred_fallthru
        _
      %p1348 = scmp.le.s32.totalorder 2, %s14
      // Predicated region
      $region45: #{incre_lora_qkv.1} parent=5 // pred_check
        %p1349 = pneg %p1348
      $region46: #{incre_lora_qkv.1} parent=5 // pred_check_branch
        %1351 = sbr.rel (%p1349) target = $region48
      $region47: #{incre_lora_qkv.1} parent=5 // pred_region
        %s1352 = ssub.s32 %s14, 2
        // Predicated region
        $region49: #{incre_lora_qkv.1} parent=47 // pred_check
          %p1353 = pneg %p182
        $region50: #{incre_lora_qkv.1} parent=47 // pred_check_branch
          %1355 = sbr.rel (%p1353) target = $region52
        $region51: #{incre_lora_qkv.1} parent=47 // pred_region
          %s1356 = sand.u32 %s167, 1
          %s1357 = scalar_lea.sflag [#allocation3], %s1356
          %s1358 = sand.u32 %s167, 1
          %s1359 = smul.addr %s1358, 384
          %s1360 = scalar_lea.vmem [#allocation2], %s1359
          %1361 = dma.done %s1357, 6144
        $region52: #{incre_lora_qkv.1} parent=47 // pred_fallthru
          _
      $region48: #{incre_lora_qkv.1} parent=5 // pred_fallthru
        _
    $region6: #{incre_lora_qkv.1} parent=1 // loop_footer
      %s18 = sadd.s32 1, %s14
    $region7: #{incre_lora_qkv.1} parent=1 // loop_footer_branch
      %13 = sbr.rel target = $region3
    $region8: #{incre_lora_qkv.1} parent=1 // loop_exit
      _
    %1362 = vsyncpa [#allocation3], 1
    %s1363 = scalar_lea.sflag [#allocation3], 1
    %1364 = vsyncpa %s1363, 1

</llo_original>
